<compile_context>
chip_gen: v5e
topology: v5e:2x2
jax: 0.10.0
libtpu: 0.0.40
codegen_flags: <defaults>
</compile_context>

<pallas_src>
import jax
import jax.numpy as jnp
from jax.experimental import pallas as pl
from jax.experimental.pallas import tpu as pltpu

SUBLANE = 8  # f32 sublane width (second-to-last dim granularity)


def _round_up(n, m):
    return -(-n // m) * m


def _mlp_kernel(x_ref, w1_ref, b1_ref, w2_ref, b2_ref, w3_ref, b3_ref, o_ref):
    # x_ref: (tile_b, 70)  w1: (70,128)  w2: (128,64)  w3: (64,7)  biases: (1, out)
    x = x_ref[...]

    # Layer 1: (tile_b,70) @ (70,128) + b1 -> ReLU
    h1 = jnp.dot(x, w1_ref[...], preferred_element_type=jnp.float32) + b1_ref[...]
    h1 = jnp.maximum(h1, 0.0).astype(w2_ref.dtype)   # match next matmul operand dtype

    # Layer 2: (tile_b,128) @ (128,64) + b2 -> ReLU
    h2 = jnp.dot(h1, w2_ref[...], preferred_element_type=jnp.float32) + b2_ref[...]
    h2 = jnp.maximum(h2, 0.0).astype(w3_ref.dtype)

    # Layer 3: (tile_b,64) @ (64,7) + b3
    h3 = jnp.dot(h2, w3_ref[...], preferred_element_type=jnp.float32) + b3_ref[...]

    o_ref[...] = h3.astype(o_ref.dtype)


def _choose_tile_b(B, max_tile_b):
    # Tight tiling: minimal padding, and >= 2 grid steps for moderate batches so
    # v7x's two TensorCores both get work under dimension_semantics=("parallel",).
    n_tiles = -(-B // max_tile_b)
    if B >= 2 * SUBLANE and n_tiles < 2:
        n_tiles = 2
    tile_b = _round_up(-(-B // n_tiles), SUBLANE)
    return min(tile_b, _round_up(B, SUBLANE))


def pose_classifier_forward(x, params, *, max_tile_b=2048, use_bf16=False):
    """x: (B, input_dim) float32. params: dict of w1,b1,w2,b2,w3,b3 (natural shapes)."""
    B, d_in = x.shape
    h1_dim = params["w1"].shape[1]     # 128
    h2_dim = params["w2"].shape[1]     # 64
    num_classes = params["w3"].shape[1]  # 7

    w1, b1 = params["w1"], params["b1"]
    w2, b2 = params["w2"], params["b2"]
    w3, b3 = params["w3"], params["b3"]

    if use_bf16:
        # MXU-friendly operands on v6e/v7x; f32 accumulation preserved in-kernel.
        x = x.astype(jnp.bfloat16)
        w1, w2, w3 = (w.astype(jnp.bfloat16) for w in (w1, w2, w3))

    tile_b = _choose_tile_b(B, max_tile_b)
    grid = (pl.cdiv(B, tile_b),)

    const = lambda shape: pl.BlockSpec(shape, lambda i: (0, 0))  # VMEM-resident params

    flops = 2 * B * (d_in * h1_dim + h1_dim * h2_dim + h2_dim * num_classes)
    bytes_accessed = (
        x.dtype.itemsize * B * d_in
        + 4 * B * num_classes
        + w1.dtype.itemsize * (d_in * h1_dim + h1_dim * h2_dim + h2_dim * num_classes)
        + 4 * (h1_dim + h2_dim + num_classes)
    )

    out = pl.pallas_call(
        _mlp_kernel,
        out_shape=jax.ShapeDtypeStruct((B, num_classes), jnp.float32),
        grid_spec=pltpu.PrefetchScalarGridSpec(
            num_scalar_prefetch=0,
            grid=grid,
            in_specs=[
                pl.BlockSpec((tile_b, d_in), lambda i: (i, 0)),      # x: tiled on batch
                const(w1.shape), const(b1.shape),                    # W1, b1
                const(w2.shape), const(b2.shape),                    # W2, b2
                const(w3.shape), const(b3.shape),                    # W3, b3
            ],
            out_specs=pl.BlockSpec((tile_b, num_classes), lambda i: (i, 0)),
        ),
        compiler_params=pltpu.CompilerParams(
            dimension_semantics=("parallel",),   # batch tiles -> both TCs on v7x
            vmem_limit_bytes=32 << 20,           # safe on v7x (64 MiB) and generous for v5e/v6e
        ),
        cost_estimate=pl.CostEstimate(
            flops=flops, transcendentals=0, bytes_accessed=bytes_accessed),
    )(x, w1, b1, w2, b2, w3, b3)

    return out


def init_params(key, input_dim=70, num_classes=7):
    """Deterministic init mimicking nn.Linear shapes (stored as (in, out))."""
    ks = jax.random.split(key, 6)

    def linear(kw, kb, fan_in, fan_out):
        bound = 1.0 / jnp.sqrt(fan_in)
        w = jax.random.uniform(kw, (fan_in, fan_out), jnp.float32, -bound, bound)
        b = jax.random.uniform(kb, (1, fan_out), jnp.float32, -bound, bound)
        return w, b

    w1, b1 = linear(ks[0], ks[1], input_dim, 128)
    w2, b2 = linear(ks[2], ks[3], 128, 64)
    w3, b3 = linear(ks[4], ks[5], 64, num_classes)
    return {"w1": w1, "b1": b1, "w2": w2, "b2": b2, "w3": w3, "b3": b3}


def reference_forward(x, p):
    h = jnp.maximum(x @ p["w1"] + p["b1"], 0.0)
    h = jnp.maximum(h @ p["w2"] + p["b2"], 0.0)
    return h @ p["w3"] + p["b3"]


if __name__ == "__main__":
    key = jax.random.PRNGKey(0)
    k_x, k_p = jax.random.split(key)

    B, INPUT_DIM, NUM_CLASSES = 8, 70, 7
    x = jax.random.normal(k_x, (B, INPUT_DIM), jnp.float32)
    params = init_params(k_p, INPUT_DIM, NUM_CLASSES)

    # f32 path: exact parity with the reference.
    out = jax.block_until_ready(pose_classifier_forward(x, params))
    ref = reference_forward(x, params)
    assert out.shape == (B, NUM_CLASSES), out.shape
    assert jnp.allclose(out, ref, atol=1e-4, rtol=1e-4), "mismatch vs reference"

    # Batch that needs multiple grid steps + a partial (masked) last tile.
    x_big = jax.random.normal(k_x, (300, INPUT_DIM), jnp.float32)
    out_big = jax.block_until_ready(pose_classifier_forward(x_big, params))
    assert out_big.shape == (300, NUM_CLASSES)
    assert jnp.allclose(out_big, reference_forward(x_big, params), atol=1e-4, rtol=1e-4)

    # Optional bf16-MXU path (v6e/v7x optimization) — looser tolerance by design.
    out_bf16 = jax.block_until_ready(pose_classifier_forward(x_big, params, use_bf16=True))
    assert jnp.allclose(out_bf16, reference_forward(x_big, params), atol=5e-2, rtol=5e-2)

    print("KERNEL_OK")
</pallas_src>

<mosaic_0001>
module attributes {stable_mosaic.version = 11 : i64} {
  func.func @_mlp_kernel(%arg0: i32, %arg1: memref<8x70xf32, #tpu.memory_space<vmem>>, %arg2: memref<70x128xf32, #tpu.memory_space<vmem>>, %arg3: memref<1x128xf32, #tpu.memory_space<vmem>>, %arg4: memref<128x64xf32, #tpu.memory_space<vmem>>, %arg5: memref<1x64xf32, #tpu.memory_space<vmem>>, %arg6: memref<64x7xf32, #tpu.memory_space<vmem>>, %arg7: memref<1x7xf32, #tpu.memory_space<vmem>>, %arg8: memref<8x7xf32, #tpu.memory_space<vmem>>) attributes {dimension_semantics = [#tpu.dimension_semantics<parallel>], iteration_bounds = array<i64: 1>, scalar_prefetch = 0 : i64, scratch_operands = 0 : i64, tpu.core_type = #tpu.core_type<tc>, window_params = [{transform_indices = @transform_0, window_bounds = array<i64: 8, 70>}, {pipeline_mode = #tpu.pipeline_mode<synchronous>, transform_indices = @transform_1, window_bounds = array<i64: 70, 128>}, {pipeline_mode = #tpu.pipeline_mode<synchronous>, transform_indices = @transform_2, window_bounds = array<i64: 1, 128>}, {pipeline_mode = #tpu.pipeline_mode<synchronous>, transform_indices = @transform_3, window_bounds = array<i64: 128, 64>}, {pipeline_mode = #tpu.pipeline_mode<synchronous>, transform_indices = @transform_4, window_bounds = array<i64: 1, 64>}, {pipeline_mode = #tpu.pipeline_mode<synchronous>, transform_indices = @transform_5, window_bounds = array<i64: 64, 7>}, {pipeline_mode = #tpu.pipeline_mode<synchronous>, transform_indices = @transform_6, window_bounds = array<i64: 1, 7>}, {transform_indices = @transform_7, window_bounds = array<i64: 8, 7>}]} {
    %c0 = arith.constant 0 : index
    %c0_0 = arith.constant 0 : index
    %0 = vector.load %arg1[%c0, %c0_0] : memref<8x70xf32, #tpu.memory_space<vmem>>, vector<8x70xf32>
    %c0_1 = arith.constant 0 : index
    %c0_2 = arith.constant 0 : index
    %1 = vector.load %arg2[%c0_1, %c0_2] : memref<70x128xf32, #tpu.memory_space<vmem>>, vector<70x128xf32>
    %cst = arith.constant dense<0.000000e+00> : vector<8x128xf32>
    %2 = tpu.matmul %0, %1, %cst {dimension_numbers = #tpu.dot_dimension_numbers<[1], [0], [0], [1], [0, 0, 1, 1], [], []>} : vector<8x70xf32>, vector<70x128xf32>, vector<8x128xf32> -> vector<8x128xf32>
    %c0_3 = arith.constant 0 : index
    %c0_4 = arith.constant 0 : index
    %3 = vector.load %arg3[%c0_3, %c0_4] : memref<1x128xf32, #tpu.memory_space<vmem>>, vector<1x128xf32>
    %4 = vector.broadcast %3 : vector<1x128xf32> to vector<8x128xf32>
    %5 = arith.addf %2, %4 : vector<8x128xf32>
    %cst_5 = arith.constant 0.000000e+00 : f32
    %6 = vector.broadcast %cst_5 : f32 to vector<8x128xf32>
    %7 = arith.maximumf %5, %6 : vector<8x128xf32>
    %c0_6 = arith.constant 0 : index
    %c0_7 = arith.constant 0 : index
    %8 = vector.load %arg4[%c0_6, %c0_7] : memref<128x64xf32, #tpu.memory_space<vmem>>, vector<128x64xf32>
    %cst_8 = arith.constant dense<0.000000e+00> : vector<8x64xf32>
    %9 = tpu.matmul %7, %8, %cst_8 {dimension_numbers = #tpu.dot_dimension_numbers<[1], [0], [0], [1], [0, 0, 1, 1], [], []>} : vector<8x128xf32>, vector<128x64xf32>, vector<8x64xf32> -> vector<8x64xf32>
    %c0_9 = arith.constant 0 : index
    %c0_10 = arith.constant 0 : index
    %10 = vector.load %arg5[%c0_9, %c0_10] : memref<1x64xf32, #tpu.memory_space<vmem>>, vector<1x64xf32>
    %11 = vector.broadcast %10 : vector<1x64xf32> to vector<8x64xf32>
    %12 = arith.addf %9, %11 : vector<8x64xf32>
    %cst_11 = arith.constant 0.000000e+00 : f32
    %13 = vector.broadcast %cst_11 : f32 to vector<8x64xf32>
    %14 = arith.maximumf %12, %13 : vector<8x64xf32>
    %c0_12 = arith.constant 0 : index
    %c0_13 = arith.constant 0 : index
    %15 = vector.load %arg6[%c0_12, %c0_13] : memref<64x7xf32, #tpu.memory_space<vmem>>, vector<64x7xf32>
    %cst_14 = arith.constant dense<0.000000e+00> : vector<8x7xf32>
    %16 = tpu.matmul %14, %15, %cst_14 {dimension_numbers = #tpu.dot_dimension_numbers<[1], [0], [0], [1], [0, 0, 1, 1], [], []>} : vector<8x64xf32>, vector<64x7xf32>, vector<8x7xf32> -> vector<8x7xf32>
    %c0_15 = arith.constant 0 : index
    %c0_16 = arith.constant 0 : index
    %17 = vector.load %arg7[%c0_15, %c0_16] : memref<1x7xf32, #tpu.memory_space<vmem>>, vector<1x7xf32>
    %18 = vector.broadcast %17 : vector<1x7xf32> to vector<8x7xf32>
    %19 = arith.addf %16, %18 : vector<8x7xf32>
    %c0_17 = arith.constant 0 : index
    %c0_18 = arith.constant 0 : index
    %20 = vector.load %arg8[%c0_17, %c0_18] : memref<8x7xf32, #tpu.memory_space<vmem>>, vector<8x7xf32>
    tpu.vector_store %arg8[%c0_17, %c0_18], %19 {strides = array<i32>} : memref<8x7xf32, #tpu.memory_space<vmem>>, vector<8x7xf32>,
    return
  }
  func.func @transform_0(%arg0: i32) -> (i32, i32) {
    %c0_i32 = arith.constant 0 : i32
    %c0_i32_0 = arith.constant 0 : i32
    return %arg0, %c0_i32 : i32, i32
  }
  func.func @transform_1(%arg0: i32) -> (i32, i32) {
    %c0_i32 = arith.constant 0 : i32
    %c0_i32_0 = arith.constant 0 : i32
    %c0_i32_1 = arith.constant 0 : i32
    return %c0_i32, %c0_i32_0 : i32, i32
  }
  func.func @transform_2(%arg0: i32) -> (i32, i32) {
    %c0_i32 = arith.constant 0 : i32
    %c0_i32_0 = arith.constant 0 : i32
    %c0_i32_1 = arith.constant 0 : i32
    return %c0_i32, %c0_i32_0 : i32, i32
  }
  func.func @transform_3(%arg0: i32) -> (i32, i32) {
    %c0_i32 = arith.constant 0 : i32
    %c0_i32_0 = arith.constant 0 : i32
    %c0_i32_1 = arith.constant 0 : i32
    return %c0_i32, %c0_i32_0 : i32, i32
  }
  func.func @transform_4(%arg0: i32) -> (i32, i32) {
    %c0_i32 = arith.constant 0 : i32
    %c0_i32_0 = arith.constant 0 : i32
    %c0_i32_1 = arith.constant 0 : i32
    return %c0_i32, %c0_i32_0 : i32, i32
  }
  func.func @transform_5(%arg0: i32) -> (i32, i32) {
    %c0_i32 = arith.constant 0 : i32
    %c0_i32_0 = arith.constant 0 : i32
    %c0_i32_1 = arith.constant 0 : i32
    return %c0_i32, %c0_i32_0 : i32, i32
  }
  func.func @transform_6(%arg0: i32) -> (i32, i32) {
    %c0_i32 = arith.constant 0 : i32
    %c0_i32_0 = arith.constant 0 : i32
    %c0_i32_1 = arith.constant 0 : i32
    return %c0_i32, %c0_i32_0 : i32, i32
  }
  func.func @transform_7(%arg0: i32) -> (i32, i32) {
    %c0_i32 = arith.constant 0 : i32
    %c0_i32_0 = arith.constant 0 : i32
    return %arg0, %c0_i32 : i32, i32
  }
}

</mosaic_0001>

<llo_original>
// kernel: tpu_custom_call.1
$region0: #{tpu_custom_call.1}
  #allocation0 [shape = 'u32[]', space=smem, size = 0x4, offset = 0x4, fixed_abs, tag = 'smem constant byte address 0x4 - core index']
  #allocation1 [shape = 'u32[72,128]{1,0:T(1,128)}', space=vmem, size = 0x9000, scoped, tag = 'internal scratch']
  %s0 = inlined_call_operand.vmem [shape: f32[8,70], index: 0, kind: input, shape index: {}]
  %s1 = inlined_call_operand.vmem [shape: f32[70,128], index: 1, kind: input, shape index: {}]
  %s2 = inlined_call_operand.vmem [shape: f32[1,128], index: 2, kind: input, shape index: {}]
  %s3 = inlined_call_operand.vmem [shape: f32[128,64], index: 3, kind: input, shape index: {}]
  %s4 = inlined_call_operand.vmem [shape: f32[1,64], index: 4, kind: input, shape index: {}]
  %s5 = inlined_call_operand.vmem [shape: f32[64,7], index: 5, kind: input, shape index: {}]
  %s6 = inlined_call_operand.vmem [shape: f32[1,7], index: 6, kind: input, shape index: {}]
  %s7 = inlined_call_operand.hbm [shape: f32[8,7], index: 7, kind: output, shape index: {}]
  %s8 = sld [smem:[#allocation0]]
  $region38: #{tpu_custom_call.1} parent=0
    _
  %s10 = ssub.s32 1, %s8
  %s11 = scalar_select 0, %s10, %s8
  $region1: #{tpu_custom_call.1} parent=0
    #allocation2 [shape = 'u8[4096]{0}', space=vmem, size = 0x1000, scoped, tag = 'output window, operand 0, single buffered']
    #allocation3 [shape = 's32[1]{0}', space=sflag, size = 0x4, scoped, tag = 'scoped memory for tpu_custom_call.1']
    %12 = vsyncpa [#allocation3], 0
    // Predicated region
    $region2: #{tpu_custom_call.1} parent=1 // pred_check
      _
    $region3: #{tpu_custom_call.1} parent=1 // pred_check_branch
      %14 = sbr.rel (0) target = $region5
    $region4: #{tpu_custom_call.1} parent=1 // pred_region
      _
    $region5: #{tpu_custom_call.1} parent=1 // pred_fallthru
      _
    // Predicated region
    $region6: #{tpu_custom_call.1} parent=1 // pred_check
      _
    $region7: #{tpu_custom_call.1} parent=1 // pred_check_branch
      %16 = sbr.rel (0) target = $region9
    $region8: #{tpu_custom_call.1} parent=1 // pred_region
      _
    $region9: #{tpu_custom_call.1} parent=1 // pred_fallthru
      _
    // Predicated region
    $region10: #{tpu_custom_call.1} parent=1 // pred_check
      _
    $region11: #{tpu_custom_call.1} parent=1 // pred_check_branch
      %18 = sbr.rel (0) target = $region13
    $region12: #{tpu_custom_call.1} parent=1 // pred_region
      _
    $region13: #{tpu_custom_call.1} parent=1 // pred_fallthru
      _
    // Predicated region
    $region14: #{tpu_custom_call.1} parent=1 // pred_check
      _
    $region15: #{tpu_custom_call.1} parent=1 // pred_check_branch
      %20 = sbr.rel (0) target = $region17
    $region16: #{tpu_custom_call.1} parent=1 // pred_region
      _
    $region17: #{tpu_custom_call.1} parent=1 // pred_fallthru
      _
    // Predicated region
    $region18: #{tpu_custom_call.1} parent=1 // pred_check
      _
    $region19: #{tpu_custom_call.1} parent=1 // pred_check_branch
      %22 = sbr.rel (0) target = $region21
    $region20: #{tpu_custom_call.1} parent=1 // pred_region
      _
    $region21: #{tpu_custom_call.1} parent=1 // pred_fallthru
      _
    // Predicated region
    $region22: #{tpu_custom_call.1} parent=1 // pred_check
      _
    $region23: #{tpu_custom_call.1} parent=1 // pred_check_branch
      %24 = sbr.rel (0) target = $region25
    $region24: #{tpu_custom_call.1} parent=1 // pred_region
      _
    $region25: #{tpu_custom_call.1} parent=1 // pred_fallthru
      _
    // Predicated region
    $region26: #{tpu_custom_call.1} parent=1 // pred_check
      _
    $region27: #{tpu_custom_call.1} parent=1 // pred_check_branch
      %26 = sbr.rel (0) target = $region29
    $region28: #{tpu_custom_call.1} parent=1 // pred_region
      _
    $region29: #{tpu_custom_call.1} parent=1 // pred_fallthru
      _
    %v27 = vld [vmem:[%s0] sm:$0xff]
    %v28 = vld [vmem:[%s1] sm:$0xff]
    %v29 = vld [vmem:[%s1 + $0x8] sm:$0xff]
    %v30 = vld [vmem:[%s1 + $0x10] sm:$0xff]
    %v31 = vld [vmem:[%s1 + $0x18] sm:$0xff]
    %v32 = vld [vmem:[%s1 + $0x20] sm:$0xff]
    %v33 = vld [vmem:[%s1 + $0x28] sm:$0xff]
    %v34 = vld [vmem:[%s1 + $0x30] sm:$0xff]
    %v35 = vld [vmem:[%s1 + $0x38] sm:$0xff]
    %v36 = vld [vmem:[%s1 + $0x40] sm:$0x3f]
    %v37 = vld [vmem:[%s2] sm:$0x1]
    %v39 = vperm.slane %v37, 0
    %vm41 = vcmask 572416
    %v43 = vsel %vm41, %v27, 0
    %vm45 = vcmask 1045504
    %v47 = vsel %vm45, %v36, 0
    %49 = vmatpush.msra.mxu0 0.0
    %50 = vmatpush.msra.mxu0 0.0
    %51 = vmatpush.msra.mxu0 0.0
    %52 = vmatpush.msra.mxu0 0.0
    %53 = vmatpush.msra.mxu0 0.0
    %54 = vmatpush.msra.mxu0 0.0
    %55 = vmatpush.msra.mxu0 0.0
    %56 = vmatpush.msra.mxu0 %v47
    %57 = vmatpush.msra.mxu0 %v35
    %58 = vmatpush.msra.mxu0 %v34
    %59 = vmatpush.msra.mxu0 %v33
    %60 = vmatpush.msra.mxu0 %v32
    %61 = vmatpush.msra.mxu0 %v31
    %62 = vmatpush.msra.mxu0 %v30
    %63 = vmatpush.msra.mxu0 %v29
    %64 = vmatpush.msra.mxu0 %v28
    %65 = vmatmul.f32.gmra.mxu0 %v43
    %v66 = vpop.f32.mrf.mxu0
    %v67 = vadd.f32 %v39, %v66
    %68 = vdwg.mxu0
    %v69 = vmax.f32 %v67, 0.0
    %v70 = vld [vmem:[%s3] sm:$0xff]
    %v71 = vld [vmem:[%s3 + $0x8] sm:$0xff]
    %v72 = vld [vmem:[%s3 + $0x10] sm:$0xff]
    %v73 = vld [vmem:[%s3 + $0x18] sm:$0xff]
    %v74 = vld [vmem:[%s3 + $0x20] sm:$0xff]
    %v75 = vld [vmem:[%s3 + $0x28] sm:$0xff]
    %v76 = vld [vmem:[%s3 + $0x30] sm:$0xff]
    %v77 = vld [vmem:[%s3 + $0x38] sm:$0xff]
    %v78 = vld [vmem:[%s3 + $0x40] sm:$0xff]
    %v79 = vld [vmem:[%s3 + $0x48] sm:$0xff]
    %v80 = vld [vmem:[%s3 + $0x50] sm:$0xff]
    %v81 = vld [vmem:[%s3 + $0x58] sm:$0xff]
    %v82 = vld [vmem:[%s3 + $0x60] sm:$0xff]
    %v83 = vld [vmem:[%s3 + $0x68] sm:$0xff]
    %v84 = vld [vmem:[%s3 + $0x70] sm:$0xff]
    %v85 = vld [vmem:[%s3 + $0x78] sm:$0xff]
    %v86 = vld [vmem:[%s4] sm:$0x1]
    %v88 = vperm.slane %v86, 0
    %90 = vmatpush.msra.mxu0 %v85
    %91 = vmatpush.msra.mxu0 %v84
    %92 = vmatpush.msra.mxu0 %v83
    %93 = vmatpush.msra.mxu0 %v82
    %94 = vmatpush.msra.mxu0 %v81
    %95 = vmatpush.msra.mxu0 %v80
    %96 = vmatpush.msra.mxu0 %v79
    %97 = vmatpush.msra.mxu0 %v78
    %98 = vmatpush.msra.mxu0 %v77
    %99 = vmatpush.msra.mxu0 %v76
    %100 = vmatpush.msra.mxu0 %v75
    %101 = vmatpush.msra.mxu0 %v74
    %102 = vmatpush.msra.mxu0 %v73
    %103 = vmatpush.msra.mxu0 %v72
    %104 = vmatpush.msra.mxu0 %v71
    %105 = vmatpush.msra.mxu0 %v70
    %106 = vmatmul.f32.gmra.mxu0 %v69
    %v107 = vpop.f32.mrf.mxu0
    %v108 = vadd.f32 %v88, %v107
    %109 = vdwg.mxu0
    %v110 = vmax.f32 %v108, 0.0
    %v111 = vld [vmem:[%s5] sm:$0xff]
    %v112 = vld [vmem:[%s5 + $0x8] sm:$0xff]
    %v113 = vld [vmem:[%s5 + $0x10] sm:$0xff]
    %v114 = vld [vmem:[%s5 + $0x18] sm:$0xff]
    %v115 = vld [vmem:[%s5 + $0x20] sm:$0xff]
    %v116 = vld [vmem:[%s5 + $0x28] sm:$0xff]
    %v117 = vld [vmem:[%s5 + $0x30] sm:$0xff]
    %v118 = vld [vmem:[%s5 + $0x38] sm:$0xff]
    %v119 = vld [vmem:[%s6] sm:$0x1]
    %v121 = vperm.slane %v119, 0
    %vm123 = vcmask 523264
    %v125 = vsel %vm123, %v110, 0
    %127 = vmatpush.msra.mxu0 0.0
    %128 = vmatpush.msra.mxu0 0.0
    %129 = vmatpush.msra.mxu0 0.0
    %130 = vmatpush.msra.mxu0 0.0
    %131 = vmatpush.msra.mxu0 0.0
    %132 = vmatpush.msra.mxu0 0.0
    %133 = vmatpush.msra.mxu0 0.0
    %134 = vmatpush.msra.mxu0 0.0
    %135 = vmatpush.msra.mxu0 %v118
    %136 = vmatpush.msra.mxu0 %v117
    %137 = vmatpush.msra.mxu0 %v116
    %138 = vmatpush.msra.mxu0 %v115
    %139 = vmatpush.msra.mxu0 %v114
    %140 = vmatpush.msra.mxu0 %v113
    %141 = vmatpush.msra.mxu0 %v112
    %142 = vmatpush.msra.mxu0 %v111
    %143 = vmatmul.f32.gmra.mxu0 %v125
    %v144 = vpop.f32.mrf.mxu0
    %v145 = vadd.f32 %v121, %v144
    %146 = vdwg.mxu0
    %vm147 = vcmask 56320
    %148 = vst.msk [vmem:[#allocation2] sm:$0xff] %vm147, %v145
    // Predicated region
    $region30: #{tpu_custom_call.1} parent=1 // pred_check
      _
    $region31: #{tpu_custom_call.1} parent=1 // pred_check_branch
      %150 = sbr.rel (0) target = $region33
    $region32: #{tpu_custom_call.1} parent=1 // pred_region
      %152 = vsyncadd [#allocation3], 0
      %s154 = sshll.u32 [#allocation2], 4
      %s155 = int_to_ptr.vmem [resolvable:$true] %s154
      %s156 = sshll.u32 %s7, 4
      %s157 = int_to_ptr.hbm [resolvable:$true] %s156
      %159 = dma.vmem_to_hbm [thread:$0]  %s155, 128, %s157, [#allocation3]
    $region33: #{tpu_custom_call.1} parent=1 // pred_fallthru
      _
    // Predicated region
    $region34: #{tpu_custom_call.1} parent=1 // pred_check
      _
    $region35: #{tpu_custom_call.1} parent=1 // pred_check_branch
      %161 = sbr.rel (0) target = $region37
    $region36: #{tpu_custom_call.1} parent=1 // pred_region
      %163 = dma.done [#allocation3], 128
    $region37: #{tpu_custom_call.1} parent=1 // pred_fallthru
      _
    %164 = vsyncpa [#allocation3], 1

</llo_original>
